<compile_context>
chip_gen: v6e
topology: v6e:2x2x1
jax: 0.10.0
libtpu: 0.0.40
codegen_flags: <defaults>
</compile_context>

<pallas_src>
import functools

import jax
import jax.numpy as jnp
from jax.experimental import pallas as pl
from jax.experimental.pallas import tpu as pltpu


_NEG = -1e30  # finite sentinel: masked columns / running-max init (keep finite!)


def _round_up(x: int, m: int) -> int:
    return ((x + m - 1) // m) * m


def _cdiv(a: int, b: int) -> int:
    return (a + b - 1) // b


def _lse_kernel(logits_ref, out_ref, m_ref, l_ref, *, num_rows, num_cols):
    # NOTE: pl.program_id / pl.num_programs must be called at the top level of
    # the kernel body (never inside pl.when bodies) — the primitive cannot be
    # lowered from inside a cond-branch jaxpr.
    i = pl.program_id(0)            # batch tile index ("parallel")
    j = pl.program_id(1)            # class tile index (reduction, "arbitrary")
    nc = pl.num_programs(1)

    @pl.when(j == 0)
    def _init():
        m_ref[...] = jnp.full(m_ref.shape, _NEG, m_ref.dtype)
        l_ref[...] = jnp.zeros_like(l_ref)

    x = logits_ref[...].astype(jnp.float32)            # [TB, TC]
    TB, TC = x.shape

    if num_cols % TC != 0:
        # Ragged last class tile: the out-of-bounds tail of the VMEM buffer is
        # garbage (stale / uninitialized) and MUST be masked before max/exp.
        # Compare the local lane iota against the scalar remaining-column
        # count (avoids a per-element `j*TC +` add).
        rem = num_cols - j * TC
        lane = jax.lax.broadcasted_iota(jnp.int32, (TB, TC), 1)
        x = jnp.where(lane < rem, x, _NEG)

    # --- online (flash-style) logsumexp; the log is deferred to finalize ----
    m_prev = m_ref[...]                                # [TB, 1]
    m_new = jnp.maximum(m_prev, jnp.max(x, axis=-1, keepdims=True))
    l_ref[...] = (jnp.exp(m_prev - m_new) * l_ref[...]
                  + jnp.sum(jnp.exp(x - m_new), axis=-1, keepdims=True))
    m_ref[...] = m_new

    @pl.when(j == nc - 1)
    def _finalize():
        lse = m_ref[...] + jnp.log(l_ref[...])         # [TB, 1]
        if num_rows % TB != 0:
            # Ragged last batch tile: zero out garbage rows before the sum.
            row = i * TB + jax.lax.broadcasted_iota(jnp.int32, (TB, 1), 0)
            lse = jnp.where(row < num_rows, lse, 0.0)
        # Lane-dense (1, 8, 128) partial-sum slab; wrapper reads [:, 0, 0].
        out_ref[...] = jnp.broadcast_to(jnp.sum(lse), out_ref.shape)


def mixup_loss(logits: jax.Array,
               targets_a: jax.Array,
               targets_b: jax.Array,
               lam,
               *,
               block_b: int = 512,
               block_c: int = 4096) -> jax.Array:
    """Mixup cross-entropy loss (mean reduction).

    The Pallas kernel streams the (B, C) logits once and produces per-batch-
    tile partial sums of logsumexp; the tiny O(B) target gathers and the final
    reduction are done in the wrapper.  `logits` may be float32 or bfloat16.
    """
    B, C = logits.shape
    itemsize = logits.dtype.itemsize

    # Tile sizes (multiples of (8, 128), no padding of the logits array).
    TB = min(max(8, _round_up(block_b, 8)), _round_up(B, 8))
    if B > 8 and _cdiv(B, TB) < 2:
        # v7x has 2 TensorCores; make sure the "parallel" batch axis has at
        # least 2 tiles so both cores get work.  No effect on v5e/v6e.
        TB = min(TB, max(8, _round_up(_cdiv(B, 2), 8)))
    TC = min(max(128, _round_up(block_c, 128)), _round_up(C, 128))
    # Keep the double-buffered logits tile <= ~24 MiB (fits v7x's 64 MiB VMEM).
    max_tc = max(128, ((24 << 20) // (2 * TB * itemsize)) // 128 * 128)
    TC = min(TC, max_tc)

    nb = _cdiv(B, TB)
    nc = _cdiv(C, TC)

    kernel = functools.partial(_lse_kernel, num_rows=B, num_cols=C)

    # Double-buffered input tile + two (TB, 128)-padded f32 scratches + margin.
    vmem_limit = 2 * TB * TC * itemsize + 2 * TB * 128 * 4 + (4 << 20)
    vmem_limit = int(min(max(vmem_limit, 8 << 20), 48 << 20))

    cost = pl.CostEstimate(flops=6 * B * C,
                           transcendentals=B * C,
                           bytes_accessed=B * C * itemsize + nb * 8 * 128 * 4)

    partials = pl.pallas_call(
        kernel,
        out_shape=jax.ShapeDtypeStruct((nb, 8, 128), jnp.float32),
        grid=(nb, nc),
        in_specs=[pl.BlockSpec((TB, TC), lambda i, j: (i, j))],    # logits tile
        out_specs=pl.BlockSpec((1, 8, 128), lambda i, j: (i, 0, 0)),
        scratch_shapes=[pltpu.VMEM((TB, 1), jnp.float32),          # running max
                        pltpu.VMEM((TB, 1), jnp.float32)],         # running sum
        compiler_params=pltpu.CompilerParams(
            dimension_semantics=("parallel", "arbitrary"),
            vmem_limit_bytes=vmem_limit,
        ),
        cost_estimate=cost,
    )(logits)

    lse_sum = jnp.sum(partials[:, 0, 0])

    # O(B) weighted target gather in the wrapper (negligible HBM traffic).
    lam = jnp.asarray(lam, jnp.float32)
    ta = targets_a.astype(jnp.int32)[:, None]
    tb = targets_b.astype(jnp.int32)[:, None]
    pick_a = jnp.take_along_axis(logits, ta, axis=-1).astype(jnp.float32)
    pick_b = jnp.take_along_axis(logits, tb, axis=-1).astype(jnp.float32)
    picked_sum = lam * jnp.sum(pick_a) + (1.0 - lam) * jnp.sum(pick_b)

    return (lse_sum - picked_sum) / B


def _reference_mixup_loss(logits, targets_a, targets_b, lam):
    logp = jax.nn.log_softmax(logits.astype(jnp.float32), axis=-1)
    ce_a = -jnp.take_along_axis(logp, targets_a[:, None], axis=-1).mean()
    ce_b = -jnp.take_along_axis(logp, targets_b[:, None], axis=-1).mean()
    return lam * ce_a + (1.0 - lam) * ce_b


if __name__ == "__main__":
    key = jax.random.PRNGKey(0)
    k1, k2, k3 = jax.random.split(key, 3)

    # Small shapes that still exercise the real grid path: B=20, C=300 are
    # ragged in both tile dims; with 8x128 tiles the kernel runs a (3, 3) grid
    # with online logsumexp across class tiles, with defaults it runs a (2, 1)
    # grid (batch split for the two-TensorCore case).
    B, C = 20, 300
    lam = 0.7

    logits = jax.random.normal(k1, (B, C), dtype=jnp.float32)
    targets_a = jax.random.randint(k2, (B,), 0, C, dtype=jnp.int32)
    targets_b = jax.random.randint(k3, (B,), 0, C, dtype=jnp.int32)

    ref = _reference_mixup_loss(logits, targets_a, targets_b, lam)

    loss_small = mixup_loss(logits, targets_a, targets_b, lam,
                            block_b=8, block_c=128)
    loss_small = jax.block_until_ready(loss_small)
    assert jnp.allclose(loss_small, ref, rtol=1e-4, atol=1e-4), (loss_small, ref)

    loss_default = mixup_loss(logits, targets_a, targets_b, lam)
    loss_default = jax.block_until_ready(loss_default)
    assert jnp.allclose(loss_default, ref, rtol=1e-4, atol=1e-4), (loss_default, ref)

    # TODO(synk): arbitrary user-supplied `base_loss` modules are not
    # translatable in general; this kernel specializes to CrossEntropyLoss
    # (mean reduction), the canonical mixup base loss.

    print("KERNEL_OK")
</pallas_src>

<mosaic_0001>
module attributes {stable_mosaic.version = 11 : i64} {
  func.func @_lse_kernel(%arg0: i32, %arg1: i32, %arg2: memref<8x128xf32, #tpu.memory_space<vmem>>, %arg3: memref<1x8x128xf32, #tpu.memory_space<vmem>>, %arg4: memref<8x1xf32, #tpu.memory_space<vmem>>, %arg5: memref<8x1xf32, #tpu.memory_space<vmem>>) attributes {dimension_semantics = [#tpu.dimension_semantics<parallel>, #tpu.dimension_semantics<arbitrary>], iteration_bounds = array<i64: 3, 3>, scalar_prefetch = 0 : i64, scratch_operands = 2 : i64, tpu.core_type = #tpu.core_type<tc>, window_params = [{transform_indices = @transform_0, window_bounds = array<i64: 8, 128>}, {transform_indices = @transform_1, window_bounds = array<i64: 1, 8, 128>}]} {
    %c0_i32 = arith.constant 0 : i32
    %0 = arith.cmpi eq, %arg1, %c0_i32 : i32
    %1 = arith.extui %0 : i1 to i32
    %c0_i32_0 = arith.constant 0 : i32
    %2 = arith.cmpi ne, %1, %c0_i32_0 : i32
    scf.if %2 {
      %cst_13 = arith.constant -1.000000e+30 : f32
      %30 = vector.broadcast %cst_13 : f32 to vector<8x1xf32>
      %c0_14 = arith.constant 0 : index
      %c0_15 = arith.constant 0 : index
      %31 = vector.load %arg4[%c0_14, %c0_15] : memref<8x1xf32, #tpu.memory_space<vmem>>, vector<8x1xf32>
      tpu.vector_store %arg4[%c0_14, %c0_15], %30 {strides = array<i32>} : memref<8x1xf32, #tpu.memory_space<vmem>>, vector<8x1xf32>,
      %cst_16 = arith.constant 0.000000e+00 : f32
      %32 = vector.broadcast %cst_16 : f32 to vector<8x1xf32>
      %c0_17 = arith.constant 0 : index
      %c0_18 = arith.constant 0 : index
      %33 = vector.load %arg5[%c0_17, %c0_18] : memref<8x1xf32, #tpu.memory_space<vmem>>, vector<8x1xf32>
      tpu.vector_store %arg5[%c0_17, %c0_18], %32 {strides = array<i32>} : memref<8x1xf32, #tpu.memory_space<vmem>>, vector<8x1xf32>,
    } else {
    }
    %c0 = arith.constant 0 : index
    %c0_1 = arith.constant 0 : index
    %3 = vector.load %arg2[%c0, %c0_1] : memref<8x128xf32, #tpu.memory_space<vmem>>, vector<8x128xf32>
    %c128_i32 = arith.constant 128 : i32
    %4 = arith.muli %arg1, %c128_i32 : i32
    %c300_i32 = arith.constant 300 : i32
    %5 = arith.subi %c300_i32, %4 : i32
    %6 = tpu.iota {dimensions = array<i32: 1>} : vector<8x128xi32>
    %7 = vector.broadcast %5 : i32 to vector<8x128xi32>
    %8 = arith.cmpi slt, %6, %7 : vector<8x128xi32>
    %cst = arith.constant -1.000000e+30 : f32
    %9 = vector.broadcast %cst : f32 to vector<8x128xf32>
    %10 = arith.select %8, %3, %9 : vector<8x128xi1>, vector<8x128xf32>
    %c0_2 = arith.constant 0 : index
    %c0_3 = arith.constant 0 : index
    %11 = vector.load %arg4[%c0_2, %c0_3] : memref<8x1xf32, #tpu.memory_space<vmem>>, vector<8x1xf32>
    %cst_4 = arith.constant dense<0xFF800000> : vector<8xf32>
    %12 = vector.multi_reduction <maximumf>, %10, %cst_4 [1] : vector<8x128xf32> to vector<8xf32>
    %13 = vector.shape_cast %12 : vector<8xf32> to vector<8x1xf32>
    %14 = arith.maximumf %11, %13 : vector<8x1xf32>
    %15 = arith.subf %11, %14 : vector<8x1xf32>
    %16 = math.exp %15 : vector<8x1xf32>
    %c0_5 = arith.constant 0 : index
    %c0_6 = arith.constant 0 : index
    %17 = vector.load %arg5[%c0_5, %c0_6] : memref<8x1xf32, #tpu.memory_space<vmem>>, vector<8x1xf32>
    %18 = arith.mulf %16, %17 : vector<8x1xf32>
    %19 = vector.broadcast %14 : vector<8x1xf32> to vector<8x128xf32>
    %20 = arith.subf %10, %19 : vector<8x128xf32>
    %21 = math.exp %20 : vector<8x128xf32>
    %cst_7 = arith.constant dense<0.000000e+00> : vector<8xf32>
    %22 = vector.multi_reduction <add>, %21, %cst_7 [1] : vector<8x128xf32> to vector<8xf32>
    %23 = vector.shape_cast %22 : vector<8xf32> to vector<8x1xf32>
    %24 = arith.addf %18, %23 : vector<8x1xf32>
    %c0_8 = arith.constant 0 : index
    %c0_9 = arith.constant 0 : index
    %25 = vector.load %arg5[%c0_8, %c0_9] : memref<8x1xf32, #tpu.memory_space<vmem>>, vector<8x1xf32>
    tpu.vector_store %arg5[%c0_8, %c0_9], %24 {strides = array<i32>} : memref<8x1xf32, #tpu.memory_space<vmem>>, vector<8x1xf32>,
    %c0_10 = arith.constant 0 : index
    %c0_11 = arith.constant 0 : index
    %26 = vector.load %arg4[%c0_10, %c0_11] : memref<8x1xf32, #tpu.memory_space<vmem>>, vector<8x1xf32>
    tpu.vector_store %arg4[%c0_10, %c0_11], %14 {strides = array<i32>} : memref<8x1xf32, #tpu.memory_space<vmem>>, vector<8x1xf32>,
    %c2_i32 = arith.constant 2 : i32
    %27 = arith.cmpi eq, %arg1, %c2_i32 : i32
    %28 = arith.extui %27 : i1 to i32
    %c0_i32_12 = arith.constant 0 : i32
    %29 = arith.cmpi ne, %28, %c0_i32_12 : i32
    scf.if %29 {
      %c0_13 = arith.constant 0 : index
      %c0_14 = arith.constant 0 : index
      %30 = vector.load %arg4[%c0_13, %c0_14] : memref<8x1xf32, #tpu.memory_space<vmem>>, vector<8x1xf32>
      %c0_15 = arith.constant 0 : index
      %c0_16 = arith.constant 0 : index
      %31 = vector.load %arg5[%c0_15, %c0_16] : memref<8x1xf32, #tpu.memory_space<vmem>>, vector<8x1xf32>
      %32 = math.log %31 : vector<8x1xf32>
      %33 = arith.addf %30, %32 : vector<8x1xf32>
      %c8_i32 = arith.constant 8 : i32
      %34 = arith.muli %arg0, %c8_i32 : i32
      %35 = tpu.iota {dimensions = array<i32: 0>} : vector<8x1xi32>
      %36 = vector.broadcast %34 : i32 to vector<8x1xi32>
      %37 = arith.addi %36, %35 : vector<8x1xi32>
      %c20_i32 = arith.constant 20 : i32
      %38 = vector.broadcast %c20_i32 : i32 to vector<8x1xi32>
      %39 = arith.cmpi slt, %37, %38 : vector<8x1xi32>
      %cst_17 = arith.constant 0.000000e+00 : f32
      %40 = vector.broadcast %cst_17 : f32 to vector<8x1xf32>
      %41 = arith.select %39, %33, %40 : vector<8x1xi1>, vector<8x1xf32>
      %42 = vector.shape_cast %41 : vector<8x1xf32> to vector<1x8x1xf32>
      %cst_18 = arith.constant dense<0.000000e+00> : vector<1xf32>
      %43 = vector.multi_reduction <add>, %42, %cst_18 [1, 2] : vector<1x8x1xf32> to vector<1xf32>
      %44 = vector.shape_cast %43 : vector<1xf32> to vector<1x1x1xf32>
      %45 = vector.extract %44[0, 0, 0] : f32 from vector<1x1x1xf32>
      %46 = vector.broadcast %45 : f32 to vector<1x8x128xf32>
      %c0_19 = arith.constant 0 : index
      %c0_20 = arith.constant 0 : index
      %c0_21 = arith.constant 0 : index
      %47 = vector.load %arg3[%c0_19, %c0_20, %c0_21] : memref<1x8x128xf32, #tpu.memory_space<vmem>>, vector<1x8x128xf32>
      tpu.vector_store %arg3[%c0_19, %c0_20, %c0_21], %46 {strides = array<i32>} : memref<1x8x128xf32, #tpu.memory_space<vmem>>, vector<1x8x128xf32>,
    } else {
    }
    return
  }
  func.func @transform_0(%arg0: i32, %arg1: i32) -> (i32, i32) {
    %c0_i32 = arith.constant 0 : i32
    return %arg0, %arg1 : i32, i32
  }
  func.func @transform_1(%arg0: i32, %arg1: i32) -> (i32, i32, i32) {
    %c0_i32 = arith.constant 0 : i32
    %c0_i32_0 = arith.constant 0 : i32
    %c0_i32_1 = arith.constant 0 : i32
    return %arg0, %c0_i32, %c0_i32_0 : i32, i32, i32
  }
}

</mosaic_0001>

<llo_original>
// kernel: tpu_custom_call.1
$region0: #{tpu_custom_call.1}
  #allocation0 [shape = 'u32[]', space=smem, size = 0x4, offset = 0x4, fixed_abs, tag = 'smem constant byte address 0x4 - core index']
  #allocation1 [shape = 'u32[144,128]{1,0:T(1,128)}', space=vmem, size = 0x12000, scoped, tag = 'internal scratch']
  #allocation2 [shape = 'f32[8,1]{1,0:T(8,128)}', space=vmem, size = 0x1000, scoped, tag = 'scratch operand']
  #allocation3 [shape = 'f32[8,1]{1,0:T(8,128)}', space=vmem, size = 0x1000, scoped, tag = 'scratch operand']
  %s0 = inlined_call_operand.hbm [shape: f32[20,300], index: 0, kind: input, shape index: {}]
  %s1 = inlined_call_operand.hbm [shape: f32[3,8,128], index: 1, kind: output, shape index: {}]
  %s2 = sld [smem:[#allocation0]]
  $region49: #{tpu_custom_call.1} parent=0
    _
  %s4 = ssub.s32 1, %s2
  %s5 = scalar_select 0, %s4, %s2
  $region1: #{tpu_custom_call.1} parent=0
    #allocation4 [shape = 'u8[8192]{0}', space=vmem, size = 0x2000, scoped, tag = 'input window, operand 0']
    #allocation5 [shape = 's32[2]{0}', space=sflag, size = 0x8, scoped, tag = 'scoped memory for tpu_custom_call.1']
    #allocation6 [shape = 's32[2]{0}', space=sflag, size = 0x8, scoped, tag = 'scoped memory for tpu_custom_call.1']
    #allocation7 [shape = 'u8[8192]{0}', space=vmem, size = 0x2000, scoped, tag = 'output window, operand 0']
    %6 = vsyncpa [#allocation5], 0
    %s7 = scalar_lea.sflag [#allocation5], 1
    %8 = vsyncpa %s7, 0
    %9 = vsyncpa [#allocation6], 0
    %s10 = scalar_lea.sflag [#allocation6], 1
    %11 = vsyncpa %s10, 0
    loop: start=0, step=1, limit=11
    $region2: #{tpu_custom_call.1} parent=1 // loop_pre_header
      _
    $region3: #{tpu_custom_call.1} parent=1 // loop_header
      %s13 = sphi 0, %s17
      %p14 = scmp.ge.s32.totalorder %s13, 11
      %s20 = sphi 0, %s32
      %s21 = sphi 0, %s28
      %s22 = sphi 0, %s20
      %s23 = sphi 0, %s21
      %s24 = sphi 0, %s22
      %s25 = sphi 0, %s23
      %s37 = sphi 0, %s39
      %s40 = sphi 0, %s37
      %s41 = sphi 0, %s40
      %s57 = sphi 0, %s41
      %s63 = sphi 0, %s65
      %s66 = sphi 0, %s63
      %s67 = sphi 0, %s66
      %s83 = sphi 0, %s67
    $region4: #{tpu_custom_call.1} parent=1 // loop_header_branch
      %16 = sbr.rel (%p14) target = $region8
    $region5: #{tpu_custom_call.1} parent=1 // loop_body
      %s18 = ssub.s32 %s13, 1
      %s19 = ssub.s32 %s13, 2
      %s26 = sadd.s32 1, %s21
      %p27 = scmp.ge.s32.totalorder %s26, 3
      %s28 = scalar_select %p27, 0, %s26
      %s29 = sadd.s32 1, %s20
      %s30 = scalar_select %p27, %s29, %s20
      %p31 = scmp.ge.s32.totalorder %s30, 3
      %s32 = scalar_select %p31, 0, %s30
      %s33 = ssub.s32 %s20, %s32
      %s34 = ssub.s32 %s21, %s28
      %s35 = sor.u32 %s33, %s34
      %p36 = scmp.eq.s32.totalorder %s35, 0
      %s38 = sadd.s32 %s37, 1
      %s39 = scalar_select %p36, %s37, %s38
      %p42 = pneg %p36
      %p43 = scmp.eq.s32.totalorder %s13, 8
      %p44 = por %p42, %p43
      %p45 = scmp.ne.s32.totalorder %s37, %s40
      %p46 = scmp.eq.s32.totalorder %s13, 0
      %p47 = por %p45, %p46
      %p48 = scmp.ne.s32.totalorder %s37, %s40
      %p49 = scmp.eq.s32.totalorder %s18, 8
      %p50 = por %p48, %p49
      %p51 = scmp.ne.s32.totalorder %s40, %s41
      %p52 = scmp.eq.s32.totalorder %s18, 0
      %p53 = por %p51, %p52
      %p54 = scmp.ne.s32.totalorder %s40, %s41
      %p55 = scmp.eq.s32.totalorder %s19, 8
      %p56 = por %p54, %p55
      %p58 = scmp.ne.s32.totalorder %s41, %s57
      %p59 = scmp.eq.s32.totalorder %s19, 0
      %p60 = por %p58, %p59
      %s61 = ssub.s32 %s20, %s32
      %p62 = scmp.eq.s32.totalorder %s61, 0
      %s64 = sadd.s32 %s63, 1
      %s65 = scalar_select %p62, %s63, %s64
      %p68 = pneg %p62
      %p69 = scmp.eq.s32.totalorder %s13, 8
      %p70 = por %p68, %p69
      %p71 = scmp.ne.s32.totalorder %s63, %s66
      %p72 = scmp.eq.s32.totalorder %s13, 0
      %p73 = por %p71, %p72
      %p74 = scmp.ne.s32.totalorder %s63, %s66
      %p75 = scmp.eq.s32.totalorder %s18, 8
      %p76 = por %p74, %p75
      %p77 = scmp.ne.s32.totalorder %s66, %s67
      %p78 = scmp.eq.s32.totalorder %s18, 0
      %p79 = por %p77, %p78
      %p80 = scmp.ne.s32.totalorder %s66, %s67
      %p81 = scmp.eq.s32.totalorder %s19, 8
      %p82 = por %p80, %p81
      %p84 = scmp.ne.s32.totalorder %s67, %s83
      %p85 = scmp.eq.s32.totalorder %s19, 0
      %p86 = por %p84, %p85
      %p87 = scmp.le.s32.totalorder 1, %s13
      %p88 = scmp.lt.s32.totalorder %s13, 10
      %p89 = pnand %p87, %p88
      %p90 = pneg %p89
      // Predicated region
      $region9: #{tpu_custom_call.1} parent=5 // pred_check
        _
      $region10: #{tpu_custom_call.1} parent=5 // pred_check_branch
        %92 = sbr.rel (%p89) target = $region12
      $region11: #{tpu_custom_call.1} parent=5 // pred_region
        %s93 = ssub.s32 %s13, 1
      $region12: #{tpu_custom_call.1} parent=5 // pred_fallthru
        _
      %p94 = scmp.lt.s32.totalorder %s13, 9
      // Predicated region
      $region13: #{tpu_custom_call.1} parent=5 // pred_check
        %p95 = pneg %p94
      $region14: #{tpu_custom_call.1} parent=5 // pred_check_branch
        %97 = sbr.rel (%p95) target = $region16
      $region15: #{tpu_custom_call.1} parent=5 // pred_region
        // Predicated region
        $region17: #{tpu_custom_call.1} parent=15 // pred_check
          %p98 = pneg %p47
        $region18: #{tpu_custom_call.1} parent=15 // pred_check_branch
          %100 = sbr.rel (%p98) target = $region20
        $region19: #{tpu_custom_call.1} parent=15 // pred_region
          %s101 = sand.u32 %s37, 1
          %s102 = scalar_lea.sflag [#allocation5], %s101
          %s103 = sand.u32 %s37, 1
          %s104 = smul.addr %s103, 8
          %s105 = scalar_lea.vmem [#allocation4], %s104
          %s107 = ssub.s32 128, 128
          %108 = vsyncadd %s102, %s107
          %s109 = smul.addr %s20, 3
          %s110 = sadd.s32 %s21, %s109
          %s111 = smul.addr %s110, 128
          %s112 = scalar_lea.hbm %s0, %s111
          %s114 = sshll.u32 %s105, 4
          %s115 = int_to_ptr.vmem [resolvable:$true] %s114
          %117 = dma.hbm_to_vmem [thread:$0]  %s112, 128, %s115, %s102
        $region20: #{tpu_custom_call.1} parent=15 // pred_fallthru
          _
      $region16: #{tpu_custom_call.1} parent=5 // pred_fallthru
        _
      %p118 = scmp.le.s32.totalorder 1, %s13
      %p119 = scmp.lt.s32.totalorder %s13, 10
      %p120 = pnand %p118, %p119
      %p121 = pneg %p120
      // Predicated region
      $region21: #{tpu_custom_call.1} parent=5 // pred_check
        _
      $region22: #{tpu_custom_call.1} parent=5 // pred_check_branch
        %123 = sbr.rel (%p120) target = $region24
      $region23: #{tpu_custom_call.1} parent=5 // pred_region
        %s124 = ssub.s32 %s13, 1
        %s125 = sand.u32 %s40, 1
        %s126 = scalar_lea.sflag [#allocation5], %s125
        %s127 = sand.u32 %s40, 1
        %s128 = smul.addr %s127, 8
        %s129 = scalar_lea.vmem [#allocation4], %s128
        // Predicated region
        $region25: #{tpu_custom_call.1} parent=23 // pred_check
          %p130 = pneg %p53
        $region26: #{tpu_custom_call.1} parent=23 // pred_check_branch
          %132 = sbr.rel (%p130) target = $region28
        $region27: #{tpu_custom_call.1} parent=23 // pred_region
          %133 = dma.done %s126, 128
        $region28: #{tpu_custom_call.1} parent=23 // pred_fallthru
          _
        %s134 = sand.u32 %s40, 1
        %s135 = scalar_lea.sflag [#allocation5], %s134
        %s136 = sand.u32 %s40, 1
        %s137 = smul.addr %s136, 8
        %s138 = scalar_lea.vmem [#allocation4], %s137
        %p139 = pneg %p53
        %p140 = pneg %p50
        %p141 = pneg %p79
        %p142 = pneg %p76
        %s143 = sand.u32 %s66, 1
        %s144 = scalar_lea.sflag [#allocation6], %s143
        %s145 = sand.u32 %s66, 1
        %s146 = smul.addr %s145, 8
        %s147 = scalar_lea.vmem [#allocation7], %s146
        %p148 = scmp.eq.s32.totalorder %s23, 0
        // Predicated region
        $region29: #{tpu_custom_call.1} parent=23 // pred_check
          %p149 = pneg %p148
        $region30: #{tpu_custom_call.1} parent=23 // pred_check_branch
          %151 = sbr.rel (%p149) target = $region32
        $region31: #{tpu_custom_call.1} parent=23 // pred_region
          %vm152 = vcmask 7168
          %153 = vst.msk [vmem:[#allocation2] sm:$0xff] %vm152, -1e+30
          %154 = vst.msk [vmem:[#allocation3] sm:$0xff] %vm152, 0.0
        $region32: #{tpu_custom_call.1} parent=23 // pred_fallthru
          _
        %v155 = vld [vmem:[%s129] sm:$0xff]
        %s156 = smul.u32 %s23, 128
        %s157 = ssub.s32 300, %s156
        %v158 = vlaneseq
        %v159 = vand.u32 %v158, 127
        %v160 = vstv %s157
        %vm161 = vcmp.lt.s32.totalorder %v159, %v160
        %v162 = vsel %vm161, %v155, -1e+30
        %v163 = vld [vmem:[#allocation2] sm:$0xff]
        %164 = vmax.xlane.f32.xlu0 %v162
        %v165 = vpop.xlane.xlu0 %164
        %v166 = vmax.f32 %v163, %v165
        %v167 = vsub.f32 %v163, %v166
        %v168 = vmul.f32 %v167, 1.442695
        %v169 = vpow.pop %v168
        %v170 = vld [vmem:[#allocation3] sm:$0xff]
        %v171 = vmul.f32 %v169, %v170
        %173 = vset.pattern.permute.xlu0 0
        %174 = vperm.xlu0 %173, %v166
        %v175 = vpop.permute.xlu0 %174
        %v177 = vsub.f32 %v162, %v175
        %v178 = vmul.f32 %v177, 1.442695
        %v179 = vpow.pop %v178
        %180 = vadd.xlane.f32.xlu0 %v179
        %v181 = vpop.xlane.xlu0 %180
        %v182 = vadd.f32 %v171, %v181
        %vm183 = vcmask 7168
        %184 = vst.msk [vmem:[#allocation3] sm:$0xff] %vm183, %v182
        %185 = vst.msk [vmem:[#allocation2] sm:$0xff] %vm183, %v166
        %p186 = scmp.eq.s32.totalorder %s23, 2
        // Predicated region
        $region33: #{tpu_custom_call.1} parent=23 // pred_check
          %p187 = pneg %p186
        $region34: #{tpu_custom_call.1} parent=23 // pred_check_branch
          %189 = sbr.rel (%p187) target = $region36
        $region35: #{tpu_custom_call.1} parent=23 // pred_region
          %v190 = vld [vmem:[#allocation2] sm:$0xff]
          %v191 = vld [vmem:[#allocation3] sm:$0xff]
          %v192 = vlog2.pop %v191
          %v193 = vmul.f32 %v192, 0.6931472
          %v194 = vadd.f32 %v190, %v193
          %s195 = smul.u32 %s22, 8
          %v196 = vlaneseq
          %v197 = vshrl.u32 %v196, 7
          %v198 = vstv %s195
          %v199 = vadd.s32 %v198, %v197
          %vm200 = vcmp.lt.s32.totalorder %v199, 20
          %v201 = vsel %vm200, %v194, 0.0
          %v202 = vsel %vm183, %v201, 0.0
          %203 = vadd.xlane.f32.xlu0 %v202
          %v204 = vpop.xlane.xlu0 %203
          %v205 = vrot.slane %v204, 4
          %v206 = vadd.f32 %v204, %v205
          %v207 = vrot.slane %v206, 2
          %v208 = vadd.f32 %v206, %v207
          %v209 = vrot.slane %v208, 1
          %v210 = vadd.f32 %v208, %v209
          %s211 = vtos %v210
          %v212 = vstv %s211
          %213 = vst [vmem:[%s147] sm:$0xff] %v212
        $region36: #{tpu_custom_call.1} parent=23 // pred_fallthru
          _
        %s214 = sand.u32 %s66, 1
        %s215 = scalar_lea.sflag [#allocation6], %s214
        %s216 = sand.u32 %s66, 1
        %s217 = smul.addr %s216, 8
        %s218 = scalar_lea.vmem [#allocation7], %s217
        // Predicated region
        $region37: #{tpu_custom_call.1} parent=23 // pred_check
          %p219 = pneg %p76
        $region38: #{tpu_custom_call.1} parent=23 // pred_check_branch
          %221 = sbr.rel (%p219) target = $region40
        $region39: #{tpu_custom_call.1} parent=23 // pred_region
          %s223 = ssub.s32 128, 128
          %224 = vsyncadd %s215, %s223
          %s225 = smul.addr %s22, 128
          %s226 = scalar_lea.hbm %s1, %s225
          %s228 = sshll.u32 %s218, 4
          %s229 = int_to_ptr.vmem [resolvable:$true] %s228
          %231 = dma.vmem_to_hbm [thread:$0]  %s229, 128, %s226, %s215
        $region40: #{tpu_custom_call.1} parent=23 // pred_fallthru
          _
      $region24: #{tpu_custom_call.1} parent=5 // pred_fallthru
        _
      %p232 = scmp.le.s32.totalorder 2, %s13
      // Predicated region
      $region41: #{tpu_custom_call.1} parent=5 // pred_check
        %p233 = pneg %p232
      $region42: #{tpu_custom_call.1} parent=5 // pred_check_branch
        %235 = sbr.rel (%p233) target = $region44
      $region43: #{tpu_custom_call.1} parent=5 // pred_region
        %s236 = ssub.s32 %s13, 2
        // Predicated region
        $region45: #{tpu_custom_call.1} parent=43 // pred_check
          %p237 = pneg %p82
        $region46: #{tpu_custom_call.1} parent=43 // pred_check_branch
          %239 = sbr.rel (%p237) target = $region48
        $region47: #{tpu_custom_call.1} parent=43 // pred_region
          %s240 = sand.u32 %s67, 1
          %s241 = scalar_lea.sflag [#allocation6], %s240
          %s242 = sand.u32 %s67, 1
          %s243 = smul.addr %s242, 8
          %s244 = scalar_lea.vmem [#allocation7], %s243
          %245 = dma.done %s241, 128
        $region48: #{tpu_custom_call.1} parent=43 // pred_fallthru
          _
      $region44: #{tpu_custom_call.1} parent=5 // pred_fallthru
        _
    $region6: #{tpu_custom_call.1} parent=1 // loop_footer
      %s17 = sadd.s32 1, %s13
    $region7: #{tpu_custom_call.1} parent=1 // loop_footer_branch
      %12 = sbr.rel target = $region3
    $region8: #{tpu_custom_call.1} parent=1 // loop_exit
      _
    %246 = vsyncpa [#allocation5], 1
    %s247 = scalar_lea.sflag [#allocation5], 1
    %248 = vsyncpa %s247, 1
    %249 = vsyncpa [#allocation6], 1
    %s250 = scalar_lea.sflag [#allocation6], 1
    %251 = vsyncpa %s250, 1

</llo_original>
